<compile_context>
chip_gen: v7x
topology: tpu7x:2x2x1
jax: 0.10.0
libtpu: 0.0.40
codegen_flags: <defaults>
</compile_context>

<pallas_src>
import numpy as np
import jax
import jax.numpy as jnp
from jax import lax
from jax.experimental import pallas as pl
from jax.experimental.pallas import tpu as pltpu


# -----------------------------------------------------------------------------
# Generation-aware VMEM budgets
# -----------------------------------------------------------------------------
def _round_up(x, m):
    return ((x + m - 1) // m) * m


def _lane_pad(c):
    # minor dim is padded to 128 lanes in VMEM tiles
    return _round_up(max(int(c), 1), 128)


def _divisors(n):
    return [d for d in range(1, n + 1) if n % d == 0]


def _gen_budgets():
    try:
        cap = int(pltpu.get_tpu_info().vmem_capacity_bytes)
    except Exception:
        cap = 64 * 1024 * 1024
    if cap >= 96 * 1024 * 1024:          # v5e / v6e: 128 MiB VMEM per core
        budget = 44 * 1024 * 1024
        limit = min(cap - 16 * 1024 * 1024, 100 * 1024 * 1024)
    else:                                # v7x: 64 MiB VMEM per core
        budget = 20 * 1024 * 1024
        limit = min(cap - 8 * 1024 * 1024, 56 * 1024 * 1024)
    return budget, max(limit, 32 * 1024 * 1024)


_VMEM_BUDGET, _VMEM_LIMIT = _gen_budgets()


# -----------------------------------------------------------------------------
# Conv2d(3x3, pad=1) + bias + BatchNorm2d(eval) + ReLU.
#
# Activations are flat (n, h*wf, c) with wf = round_up(w+2, 8); junk columns
# (col >= w) are zero.  A row block of th image rows is processed per grid
# step; one halo row above and below come from two extra 1-row BlockSpecs.
# -----------------------------------------------------------------------------
def _conv_vmem_est(th, wf, cin, cout):
    tb = th * wf
    kw = 3 * cin
    return (2 * tb * _lane_pad(cin) * 2                 # main input block (double-buffered)
            + (tb + 2 * wf + 16) * _lane_pad(cin) * 2   # haloed VMEM slab
            + 2 * 3 * kw * _lane_pad(cout) * 2          # resident weights
            + 2 * tb * _lane_pad(cout) * 2              # output block (double-buffered)
            + 2 * tb * _lane_pad(cout) * 4              # f32 accumulator + epilogue temp
            + 2 * tb * _lane_pad(kw) * 2                # K-concat operand + slice temps
            + (1 << 20))


def _choose_conv_th(h, wf, cin, cout):
    best = 1
    for th in _divisors(h):
        if _conv_vmem_est(th, wf, cin, cout) <= _VMEM_BUDGET:
            best = max(best, th)
    return best


def _make_conv_kernel(th, wf, w, cin, cout, nblk):
    tb = th * wf
    buf_len = tb + 2 * wf + 16

    def kernel(x_ref, ha_ref, hb_ref, w_ref, scale_ref, shift_ref, o_ref, xbuf):
        i = pl.program_id(1)

        # Assemble the haloed flat slab:
        #   [8 zero rows][row above block][tb block rows][row below block][8 zero rows]
        zrow = jnp.zeros((8, cin), xbuf.dtype)
        xbuf[0:8, :] = zrow
        xbuf[8:8 + wf, :] = ha_ref[0]
        xbuf[8 + wf:8 + wf + tb, :] = x_ref[0]
        xbuf[8 + wf + tb:8 + 2 * wf + tb, :] = hb_ref[0]
        xbuf[8 + 2 * wf + tb:buf_len, :] = zrow

        @pl.when(i == 0)            # first image row block: halo above is zero padding
        def _():
            xbuf[8:8 + wf, :] = jnp.zeros((wf, cin), xbuf.dtype)

        @pl.when(i == nblk - 1)     # last image row block: halo below is zero padding
        def _():
            xbuf[8 + wf + tb:8 + 2 * wf + tb, :] = jnp.zeros((wf, cin), xbuf.dtype)

        # 3 large-K tap GEMMs (VMEM im2col over the 3 width shifts per dh).
        acc = None
        for dh in range(3):
            base = 7 + dh * wf
            xk = jnp.concatenate(
                [xbuf[pl.ds(base + dw, tb), :] for dw in range(3)], axis=-1)
            d = jnp.dot(xk, w_ref[dh], preferred_element_type=jnp.float32)
            acc = d if acc is None else acc + d

        # bias + BatchNorm(eval) + ReLU, then zero junk columns (col >= w) so
        # the output is directly the next layer's padded-flat input.
        y = jnp.maximum(acc * scale_ref[...] + shift_ref[...], 0.0)
        y = y.reshape(th, wf, cout)
        col = lax.broadcasted_iota(jnp.int32, (th, wf, cout), 1)
        y = jnp.where(col < w, y, 0.0)
        o_ref[0] = y.reshape(tb, cout).astype(o_ref.dtype)

    return kernel


def conv3x3_bn_relu(x_flat, h, w, prep):
    """x_flat: (n, h*wf, cin) bf16 flat padded rows; returns same layout with cout."""
    taps, scale, shift = prep
    n, flat, cin = x_flat.shape
    cout = taps.shape[-1]
    wf = flat // h
    assert wf * h == flat and wf >= w + 2 and wf % 8 == 0
    th = _choose_conv_th(h, wf, cin, cout)
    nblk = h // th
    tb = th * wf

    return pl.pallas_call(
        _make_conv_kernel(th, wf, w, cin, cout, nblk),
        out_shape=jax.ShapeDtypeStruct((n, h * wf, cout), jnp.bfloat16),
        grid_spec=pltpu.PrefetchScalarGridSpec(
            num_scalar_prefetch=0,
            grid=(n, nblk),
            in_specs=[
                pl.BlockSpec((1, tb, cin), lambda b, i: (b, i, 0)),
                pl.BlockSpec((1, wf, cin),
                             lambda b, i: (b, jnp.maximum(i * th - 1, 0), 0)),
                pl.BlockSpec((1, wf, cin),
                             lambda b, i: (b, jnp.minimum(i * th + th, h - 1), 0)),
                pl.BlockSpec((3, 3 * cin, cout), lambda b, i: (0, 0, 0)),
                pl.BlockSpec((1, cout), lambda b, i: (0, 0)),
                pl.BlockSpec((1, cout), lambda b, i: (0, 0)),
            ],
            out_specs=pl.BlockSpec((1, tb, cout), lambda b, i: (b, i, 0)),
            scratch_shapes=[pltpu.VMEM((tb + 2 * wf + 16, cin), jnp.bfloat16)],
        ),
        compiler_params=pltpu.CompilerParams(
            dimension_semantics=("parallel", "parallel"),
            vmem_limit_bytes=_VMEM_LIMIT,
        ),
    )(x_flat, x_flat, x_flat, taps, scale, shift)


# -----------------------------------------------------------------------------
# MaxPool2d(kernel=3, stride=3): single-input Pallas kernel.
# H phases come from a free leading-dim reshape, W phases from in-kernel
# sublane-strided loads.  A one-time probe selects an XLA fallback if strided
# loads do not lower on this backend.
# -----------------------------------------------------------------------------
def _probe_strided_loads():
    try:
        def k(x_ref, o_ref):
            o_ref[0] = x_ref[0, :, 0, pl.ds(1, 8, 3), :]

        x = jnp.arange(2 * 4 * 3 * 24 * 128, dtype=jnp.float32).reshape(2, 4, 3, 24, 128)
        y = pl.pallas_call(
            k,
            out_shape=jax.ShapeDtypeStruct((2, 4, 8, 128), jnp.float32),
            grid_spec=pltpu.PrefetchScalarGridSpec(
                num_scalar_prefetch=0,
                grid=(2,),
                in_specs=[pl.BlockSpec((1, 4, 3, 24, 128),
                                       lambda b: (b, 0, 0, 0, 0))],
                out_specs=pl.BlockSpec((1, 4, 8, 128), lambda b: (b, 0, 0, 0)),
            ),
        )(x)
        ref = np.asarray(x)[:, :, 0, 1:24:3, :]
        np.testing.assert_allclose(np.asarray(jax.block_until_ready(y)), ref)
        return True
    except Exception:
        return False


_POOL_STRIDED_OK = _probe_strided_loads()


def _choose_pool_th(h3, wf, w3, wf3, c):
    best = 1
    for th3 in _divisors(h3):
        est = (2 * th3 * 3 * wf * _lane_pad(c) * 2
               + 2 * th3 * wf3 * _lane_pad(c) * 2
               + 4 * th3 * w3 * _lane_pad(c) * 2
               + (1 << 20))
        if est <= _VMEM_BUDGET:
            best = max(best, th3)
    return best


def _make_pool_kernel(th3, w3, wf3, c):
    def kernel(x_ref, o_ref):
        m = None
        for dh in range(3):
            for dw in range(3):
                v = x_ref[0, :, dh, pl.ds(dw, w3, 3), :]
                m = v if m is None else jnp.maximum(m, v)
        o_ref[0, :, 0:w3, :] = m
        o_ref[0, :, w3:wf3, :] = jnp.zeros((th3, wf3 - w3, c), o_ref.dtype)
    return kernel


def maxpool3(x_flat, h, w):
    n, flat, c = x_flat.shape
    wf = flat // h
    assert h % 3 == 0 and w % 3 == 0
    h3, w3 = h // 3, w // 3
    wf3 = _round_up(w3 + 2, 8)

    if _POOL_STRIDED_OK:
        th3 = _choose_pool_th(h3, wf, w3, wf3, c)
        x5 = x_flat.reshape(n, h3, 3, wf, c)
        y = pl.pallas_call(
            _make_pool_kernel(th3, w3, wf3, c),
            out_shape=jax.ShapeDtypeStruct((n, h3, wf3, c), x_flat.dtype),
            grid_spec=pltpu.PrefetchScalarGridSpec(
                num_scalar_prefetch=0,
                grid=(n, h3 // th3),
                in_specs=[pl.BlockSpec((1, th3, 3, wf, c),
                                       lambda b, j: (b, j, 0, 0, 0))],
                out_specs=pl.BlockSpec((1, th3, wf3, c),
                                       lambda b, j: (b, j, 0, 0)),
            ),
            compiler_params=pltpu.CompilerParams(
                dimension_semantics=("parallel", "parallel"),
                vmem_limit_bytes=_VMEM_LIMIT,
            ),
        )(x5)
        y = y.reshape(n, h3 * wf3, c)
    else:
        # XLA fallback (only used if sublane-strided loads do not lower here).
        x4 = x_flat.reshape(n, h, wf, c)
        y = x4[:, :, :w, :].reshape(n, h3, 3, w3, 3, c).max(axis=(2, 4))
        y = jnp.pad(y, ((0, 0), (0, 0), (0, wf3 - w3), (0, 0)))
        y = y.reshape(n, h3 * wf3, c)
    return y, h3, w3


# -----------------------------------------------------------------------------
# Fused linear head: 4x [ReLU, Linear] in a single pallas_call (weights resident
# in VMEM, final +1.0 folded into the last bias).
# -----------------------------------------------------------------------------
def _head_kernel(*refs):
    x_ref, o_ref = refs[0], refs[-1]
    wb = refs[1:-1]
    h = x_ref[...]
    for i in range(0, len(wb), 2):
        h = jnp.maximum(h, 0.0)
        h = jnp.dot(h, wb[i][...], preferred_element_type=jnp.float32) + wb[i + 1][...]
    o_ref[...] = h.astype(o_ref.dtype)


def linear_head(x, lin_prep):
    n, f = x.shape
    args = [x]
    in_specs = [pl.BlockSpec((n, f), lambda i: (0, 0))]
    for wt, b in lin_prep:
        args += [wt, b]
        in_specs += [pl.BlockSpec(wt.shape, lambda i: (0, 0)),
                     pl.BlockSpec(b.shape, lambda i: (0, 0))]
    nout = lin_prep[-1][0].shape[1]
    return pl.pallas_call(
        _head_kernel,
        out_shape=jax.ShapeDtypeStruct((n, nout), jnp.float32),
        grid_spec=pltpu.PrefetchScalarGridSpec(
            num_scalar_prefetch=0,
            grid=(1,),
            in_specs=in_specs,
            out_specs=pl.BlockSpec((n, nout), lambda i: (0, 0)),
        ),
        compiler_params=pltpu.CompilerParams(
            dimension_semantics=("arbitrary",),
            vmem_limit_bytes=_VMEM_LIMIT,
        ),
    )(*args)


# -----------------------------------------------------------------------------
# Network definition (effective layer order after the OrderedDict key overwrite).
# -----------------------------------------------------------------------------
LAYER_PLAN = ("C", "C", "P",
              "C", "C", "P",
              "C", "C", "C", "P",
              "C", "C", "C", "C", "P",
              "C", "C", "C", "C", "P")

CONV_DEFS = [(1, 64), (64, 64),
             (64, 128), (128, 256),
             (256, 256), (256, 256), (256, 256),
             (256, 512), (512, 512), (512, 512), (512, 512),
             (512, 512), (512, 512), (512, 512), (512, 512)]

HIDDEN = 514          # 512 conv features + speed + angle
NUM_OUTPUT = 128
LIN_DEFS = [(HIDDEN, HIDDEN)] * 3 + [(HIDDEN, NUM_OUTPUT)]


def init_params(key):
    conv_params = []
    for cin, cout in CONV_DEFS:
        key, k1, k2, k3, k4, k5, k6 = jax.random.split(key, 7)
        w = jax.random.normal(k1, (cout, cin, 3, 3), jnp.float32) * np.sqrt(2.0 / (cin * 9))
        b = 0.01 * jax.random.normal(k2, (cout,), jnp.float32)
        gamma = 1.0 + 0.1 * jax.random.normal(k3, (cout,), jnp.float32)
        beta = 0.1 * jax.random.normal(k4, (cout,), jnp.float32)
        mean = 0.1 * jax.random.normal(k5, (cout,), jnp.float32)
        var = jax.random.uniform(k6, (cout,), jnp.float32, minval=0.5, maxval=1.5)
        conv_params.append((w, b, gamma, beta, mean, var))
    linear_params = []
    for fin, fout in LIN_DEFS:
        key, k1, k2 = jax.random.split(key, 3)
        w = jax.random.normal(k1, (fout, fin), jnp.float32) * np.sqrt(1.0 / fin)
        b = 0.01 * jax.random.normal(k2, (fout,), jnp.float32)
        linear_params.append((w, b))
    return tuple(conv_params), tuple(linear_params)


@jax.jit
def prepare_params(conv_params, linear_params):
    """One-time layout/fold of the weights (kept out of the per-forward path)."""
    conv_prep = []
    for w, b, gamma, beta, mean, var in conv_params:
        cout, cin = w.shape[0], w.shape[1]
        if cin == 1:
            # Pad the single input channel to 8 so the first layer uses the same
            # MXU K-folded path as every other conv (the wrapper pads the image).
            w = jnp.pad(w, ((0, 0), (0, 7), (0, 0), (0, 0)))
            cin = 8
        taps = jnp.transpose(w, (2, 3, 1, 0)).reshape(3, 3 * cin, cout).astype(jnp.bfloat16)
        inv_std = 1.0 / jnp.sqrt(var + 1e-5)
        scale = (gamma * inv_std).reshape(1, cout).astype(jnp.float32)
        shift = ((b - mean) * gamma * inv_std + beta).reshape(1, cout).astype(jnp.float32)
        conv_prep.append((taps, scale, shift))
    lin_prep = []
    nlin = len(linear_params)
    for i, (w, b) in enumerate(linear_params):
        wt = jnp.transpose(w).astype(jnp.float32)
        extra = 1.0 if i == nlin - 1 else 0.0   # fold the final `+ 1.0` into the last bias
        bb = (b + extra).reshape(1, -1).astype(jnp.float32)
        lin_prep.append((wt, bb))
    return tuple(conv_prep), tuple(lin_prep)


@jax.jit
def convnet_forward(conv_prep, lin_prep, x_nchw, speed, angle):
    n = x_nchw.shape[0]
    h, w = x_nchw.shape[2], x_nchw.shape[3]
    wf = _round_up(w + 2, 8)
    # NCHW -> padded flat NHWC rows (junk cols zero), channel padded 1 -> 8.
    x = jnp.transpose(x_nchw, (0, 2, 3, 1)).astype(jnp.bfloat16)
    x = jnp.pad(x, ((0, 0), (0, 0), (0, wf - w), (0, 7)))
    x = x.reshape(n, h * wf, 8)

    ci = 0
    for op in LAYER_PLAN:
        if op == "C":
            x = conv3x3_bn_relu(x, h, w, conv_prep[ci])
            ci += 1
        else:
            x, h, w = maxpool3(x, h, w)

    # final spatial is 1x1: flat position 0 holds the 512 features (NCHW flatten
    # of a 1x1 map is just the channel vector).
    feats = x[:, 0, :].astype(jnp.float32)
    feats = jnp.concatenate([feats, speed.reshape(n, 1), angle.reshape(n, 1)], axis=1)
    return linear_head(feats, lin_prep)


@jax.jit
def reference_forward(conv_params, linear_params, x_nchw, speed, angle):
    """Pure-JAX f32 reference used only for a correctness check."""
    x = jnp.transpose(x_nchw, (0, 2, 3, 1))
    ci = 0
    for op in LAYER_PLAN:
        if op == "C":
            w, b, gamma, beta, mean, var = conv_params[ci]
            ci += 1
            wk = jnp.transpose(w, (2, 3, 1, 0))
            x = lax.conv_general_dilated(x, wk, (1, 1), ((1, 1), (1, 1)),
                                         dimension_numbers=("NHWC", "HWIO", "NHWC"))
            x = (x + b - mean) / jnp.sqrt(var + 1e-5) * gamma + beta
            x = jnp.maximum(x, 0.0)
        else:
            n, hh, wd, c = x.shape
            ho, wo = hh // 3, wd // 3
            x = x[:, :ho * 3, :wo * 3, :].reshape(n, ho, 3, wo, 3, c).max(axis=(2, 4))
    n = x.shape[0]
    x = jnp.transpose(x, (0, 3, 1, 2)).reshape(n, -1)
    x = jnp.concatenate([x, speed.reshape(n, 1), angle.reshape(n, 1)], axis=1)
    for w, b in linear_params:
        x = jnp.maximum(x, 0.0) @ w.T + b
    return x + 1.0


if __name__ == "__main__":
    key = jax.random.PRNGKey(0)
    kp, kx, ks, ka = jax.random.split(key, 4)
    conv_params, linear_params = init_params(kp)
    conv_prep, lin_prep = prepare_params(conv_params, linear_params)

    # 243 = 3^5 is the smallest spatial size surviving five MaxPool2d(3) layers.
    x = jax.random.normal(kx, (2, 1, 243, 243), jnp.float32)
    speed = jax.random.normal(ks, (2,), jnp.float32)
    angle = jax.random.normal(ka, (2,), jnp.float32)

    out = jax.block_until_ready(convnet_forward(conv_prep, lin_prep, x, speed, angle))
    ref = jax.block_until_ready(reference_forward(conv_params, linear_params, x, speed, angle))

    assert out.shape == (2, NUM_OUTPUT)
    out_np, ref_np = np.asarray(out, np.float32), np.asarray(ref, np.float32)
    # bf16 conv stack vs f32 reference: tight relative-L2 check + loose elementwise check.
    rel_l2 = np.linalg.norm(out_np - ref_np) / (np.linalg.norm(ref_np) + 1e-12)
    assert rel_l2 < 3e-2, f"relative L2 error too large: {rel_l2}"
    np.testing.assert_allclose(out_np, ref_np, rtol=1e-1, atol=1e-1)
    print("KERNEL_OK")
</pallas_src>

<mosaic_0001>
module attributes {stable_mosaic.version = 11 : i64} {
  func.func @k(%arg0: i32, %arg1: memref<1x4x3x24x128xf32, #tpu.memory_space<vmem>>, %arg2: memref<1x4x8x128xf32, #tpu.memory_space<vmem>>) attributes {dimension_semantics = [#tpu.dimension_semantics<arbitrary>], iteration_bounds = array<i64: 2>, scalar_prefetch = 0 : i64, scratch_operands = 0 : i64, tpu.core_type = #tpu.core_type<tc>, window_params = [{transform_indices = @transform_0, window_bounds = array<i64: 1, 4, 3, 24, 128>}, {transform_indices = @transform_1, window_bounds = array<i64: 1, 4, 8, 128>}]} {
    %c0 = arith.constant 0 : index
    %c0_0 = arith.constant 0 : index
    %c0_1 = arith.constant 0 : index
    %c1 = arith.constant 1 : index
    %c0_2 = arith.constant 0 : index
    %0 = tpu.strided_load %arg1[%c0, %c0_0, %c0_1, %c1, %c0_2] {strides = array<i32: 1, 1, 1, 3, 1>} : memref<1x4x3x24x128xf32, #tpu.memory_space<vmem>>, vector<1x4x1x8x128xf32>
    %1 = vector.shape_cast %0 : vector<1x4x1x8x128xf32> to vector<4x8x128xf32>
    %c0_3 = arith.constant 0 : index
    %c0_4 = arith.constant 0 : index
    %c0_5 = arith.constant 0 : index
    %c0_6 = arith.constant 0 : index
    %2 = vector.load %arg2[%c0_3, %c0_4, %c0_5, %c0_6] : memref<1x4x8x128xf32, #tpu.memory_space<vmem>>, vector<1x4x8x128xf32>
    %3 = vector.shape_cast %2 : vector<1x4x8x128xf32> to vector<4x8x128xf32>
    %4 = vector.shape_cast %1 : vector<4x8x128xf32> to vector<1x4x8x128xf32>
    tpu.vector_store %arg2[%c0_3, %c0_4, %c0_5, %c0_6], %4 {strides = array<i32>} : memref<1x4x8x128xf32, #tpu.memory_space<vmem>>, vector<1x4x8x128xf32>,
    return
  }
  func.func @transform_0(%arg0: i32) -> (i32, i32, i32, i32, i32) {
    %c0_i32 = arith.constant 0 : i32
    %c0_i32_0 = arith.constant 0 : i32
    %c0_i32_1 = arith.constant 0 : i32
    %c0_i32_2 = arith.constant 0 : i32
    %c0_i32_3 = arith.constant 0 : i32
    return %arg0, %c0_i32, %c0_i32_0, %c0_i32_1, %c0_i32_2 : i32, i32, i32, i32, i32
  }
  func.func @transform_1(%arg0: i32) -> (i32, i32, i32, i32) {
    %c0_i32 = arith.constant 0 : i32
    %c0_i32_0 = arith.constant 0 : i32
    %c0_i32_1 = arith.constant 0 : i32
    %c0_i32_2 = arith.constant 0 : i32
    return %arg0, %c0_i32, %c0_i32_0, %c0_i32_1 : i32, i32, i32, i32
  }
}

</mosaic_0001>

<llo_original>
// kernel: tpu_custom_call.1
$region0: #{tpu_custom_call.1}
  #allocation0 [shape = 'u32[]', space=smem, size = 0x4, offset = 0x4, fixed_abs, tag = 'smem constant byte address 0x4 - core index']
  #allocation1 [shape = 'u32[144,128]{1,0:T(1,128)}', space=vmem, size = 0x12000, scoped, tag = 'internal scratch']
  %s0 = inlined_call_operand.hbm [shape: f32[2,4,3,24,128], index: 0, kind: input, shape index: {}]
  %s1 = inlined_call_operand.hbm [shape: f32[2,4,8,128], index: 1, kind: output, shape index: {}]
  %s2 = sld [smem:[#allocation0]]
  $region41: #{tpu_custom_call.1} parent=0
    _
  %s4 = ssub.s32 1, %s2
  %s5 = scalar_select 0, %s4, %s2
  $region1: #{tpu_custom_call.1} parent=0
    #allocation2 [shape = 'u8[294912]{0}', space=vmem, size = 0x48000, scoped, tag = 'input window, operand 0']
    #allocation3 [shape = 's32[2]{0}', space=sflag, size = 0x8, scoped, tag = 'scoped memory for tpu_custom_call.1']
    #allocation4 [shape = 's32[2]{0}', space=sflag, size = 0x8, scoped, tag = 'scoped memory for tpu_custom_call.1']
    #allocation5 [shape = 'u8[32768]{0}', space=vmem, size = 0x8000, scoped, tag = 'output window, operand 0']
    %6 = vsyncpa [#allocation3], 0
    %s7 = scalar_lea.sflag [#allocation3], 1
    %8 = vsyncpa %s7, 0
    %9 = vsyncpa [#allocation4], 0
    %s10 = scalar_lea.sflag [#allocation4], 1
    %11 = vsyncpa %s10, 0
    loop: start=0, step=1, limit=4
    $region2: #{tpu_custom_call.1} parent=1 // loop_pre_header
      _
    $region3: #{tpu_custom_call.1} parent=1 // loop_header
      %s13 = sphi 0, %s17
      %p14 = scmp.ge.s32.totalorder %s13, 4
      %s23 = sphi 0, %s25
      %s26 = sphi 0, %s23
      %s27 = sphi 0, %s26
      %s43 = sphi 0, %s27
      %s49 = sphi 0, %s51
      %s52 = sphi 0, %s49
      %s53 = sphi 0, %s52
      %s69 = sphi 0, %s53
    $region4: #{tpu_custom_call.1} parent=1 // loop_header_branch
      %16 = sbr.rel (%p14) target = $region8
    $region5: #{tpu_custom_call.1} parent=1 // loop_body
      %s18 = ssub.s32 %s13, 1
      %s19 = ssub.s32 %s13, 2
      %s20 = sadd.s32 %s13, 1
      %s21 = ssub.s32 %s13, %s20
      %p22 = scmp.eq.s32.totalorder %s21, 0
      %s24 = sadd.s32 %s23, 1
      %s25 = scalar_select %p22, %s23, %s24
      %p28 = pneg %p22
      %p29 = scmp.eq.s32.totalorder %s13, 1
      %p30 = por %p28, %p29
      %p31 = scmp.ne.s32.totalorder %s23, %s26
      %p32 = scmp.eq.s32.totalorder %s13, 0
      %p33 = por %p31, %p32
      %p34 = scmp.ne.s32.totalorder %s23, %s26
      %p35 = scmp.eq.s32.totalorder %s18, 1
      %p36 = por %p34, %p35
      %p37 = scmp.ne.s32.totalorder %s26, %s27
      %p38 = scmp.eq.s32.totalorder %s18, 0
      %p39 = por %p37, %p38
      %p40 = scmp.ne.s32.totalorder %s26, %s27
      %p41 = scmp.eq.s32.totalorder %s19, 1
      %p42 = por %p40, %p41
      %p44 = scmp.ne.s32.totalorder %s27, %s43
      %p45 = scmp.eq.s32.totalorder %s19, 0
      %p46 = por %p44, %p45
      %s47 = ssub.s32 %s13, %s20
      %p48 = scmp.eq.s32.totalorder %s47, 0
      %s50 = sadd.s32 %s49, 1
      %s51 = scalar_select %p48, %s49, %s50
      %p54 = pneg %p48
      %p55 = scmp.eq.s32.totalorder %s13, 1
      %p56 = por %p54, %p55
      %p57 = scmp.ne.s32.totalorder %s49, %s52
      %p58 = scmp.eq.s32.totalorder %s13, 0
      %p59 = por %p57, %p58
      %p60 = scmp.ne.s32.totalorder %s49, %s52
      %p61 = scmp.eq.s32.totalorder %s18, 1
      %p62 = por %p60, %p61
      %p63 = scmp.ne.s32.totalorder %s52, %s53
      %p64 = scmp.eq.s32.totalorder %s18, 0
      %p65 = por %p63, %p64
      %p66 = scmp.ne.s32.totalorder %s52, %s53
      %p67 = scmp.eq.s32.totalorder %s19, 1
      %p68 = por %p66, %p67
      %p70 = scmp.ne.s32.totalorder %s53, %s69
      %p71 = scmp.eq.s32.totalorder %s19, 0
      %p72 = por %p70, %p71
      %p73 = scmp.le.s32.totalorder 1, %s13
      %p74 = scmp.lt.s32.totalorder %s13, 3
      %p75 = pnand %p73, %p74
      %p76 = pneg %p75
      // Predicated region
      $region9: #{tpu_custom_call.1} parent=5 // pred_check
        _
      $region10: #{tpu_custom_call.1} parent=5 // pred_check_branch
        %78 = sbr.rel (%p75) target = $region12
      $region11: #{tpu_custom_call.1} parent=5 // pred_region
        %s79 = ssub.s32 %s13, 1
      $region12: #{tpu_custom_call.1} parent=5 // pred_fallthru
        _
      %p80 = scmp.lt.s32.totalorder %s13, 2
      // Predicated region
      $region13: #{tpu_custom_call.1} parent=5 // pred_check
        %p81 = pneg %p80
      $region14: #{tpu_custom_call.1} parent=5 // pred_check_branch
        %83 = sbr.rel (%p81) target = $region16
      $region15: #{tpu_custom_call.1} parent=5 // pred_region
        // Predicated region
        $region17: #{tpu_custom_call.1} parent=15 // pred_check
          %p84 = pneg %p33
        $region18: #{tpu_custom_call.1} parent=15 // pred_check_branch
          %86 = sbr.rel (%p84) target = $region20
        $region19: #{tpu_custom_call.1} parent=15 // pred_region
          %s87 = sand.u32 %s23, 1
          %s88 = scalar_lea.sflag [#allocation3], %s87
          %s89 = sand.u32 %s23, 1
          %s90 = smul.addr %s89, 288
          %s91 = scalar_lea.vmem [#allocation2], %s90
          %s93 = ssub.s32 4608, 4608
          %94 = vsyncadd %s88, %s93
          %s95 = smul.addr %s13, 36
          %s96 = smul.addr %s95, 128
          %s97 = scalar_lea.hbm %s0, %s96
          %s98 = sshll.u32 %s91, 4
          %s99 = int_to_ptr.vmem [resolvable:$true] %s98
          %104 = dma.hbm_to_vmem [thread:$0]  %s97, 4608, %s99, %s88, 128, 128, 8
        $region20: #{tpu_custom_call.1} parent=15 // pred_fallthru
          _
      $region16: #{tpu_custom_call.1} parent=5 // pred_fallthru
        _
      %p105 = scmp.le.s32.totalorder 1, %s13
      %p106 = scmp.lt.s32.totalorder %s13, 3
      %p107 = pnand %p105, %p106
      %p108 = pneg %p107
      // Predicated region
      $region21: #{tpu_custom_call.1} parent=5 // pred_check
        _
      $region22: #{tpu_custom_call.1} parent=5 // pred_check_branch
        %110 = sbr.rel (%p107) target = $region24
      $region23: #{tpu_custom_call.1} parent=5 // pred_region
        %s111 = ssub.s32 %s13, 1
        %s112 = sand.u32 %s26, 1
        %s113 = scalar_lea.sflag [#allocation3], %s112
        %s114 = sand.u32 %s26, 1
        %s115 = smul.addr %s114, 288
        %s116 = scalar_lea.vmem [#allocation2], %s115
        // Predicated region
        $region25: #{tpu_custom_call.1} parent=23 // pred_check
          %p117 = pneg %p39
        $region26: #{tpu_custom_call.1} parent=23 // pred_check_branch
          %119 = sbr.rel (%p117) target = $region28
        $region27: #{tpu_custom_call.1} parent=23 // pred_region
          %120 = dma.done %s113, 4608
        $region28: #{tpu_custom_call.1} parent=23 // pred_fallthru
          _
        %s121 = sand.u32 %s26, 1
        %s122 = scalar_lea.sflag [#allocation3], %s121
        %s123 = sand.u32 %s26, 1
        %s124 = smul.addr %s123, 288
        %s125 = scalar_lea.vmem [#allocation2], %s124
        %p126 = pneg %p39
        %p127 = pneg %p36
        %p128 = pneg %p65
        %p129 = pneg %p62
        %s130 = sand.u32 %s52, 1
        %s131 = scalar_lea.sflag [#allocation4], %s130
        %s132 = sand.u32 %s52, 1
        %s133 = smul.addr %s132, 32
        %s134 = scalar_lea.vmem [#allocation5], %s133
        %s135 = scalar_lea.vmem %s116, 1 [#allocation2]
        %v136 = vld [vmem:[%s135] ss:$3 sm:$0xff]
        %s137 = scalar_lea.vmem %s116, 73 [#allocation2]
        %v138 = vld [vmem:[%s137] ss:$3 sm:$0xff]
        %s139 = scalar_lea.vmem %s116, 145 [#allocation2]
        %v140 = vld [vmem:[%s139] ss:$3 sm:$0xff]
        %s141 = scalar_lea.vmem %s116, 217 [#allocation2]
        %v142 = vld [vmem:[%s141] ss:$3 sm:$0xff]
        %143 = vst [vmem:[%s134] sm:$0xff] %v136
        %144 = vst [vmem:[%s134 + $0x8] sm:$0xff] %v138
        %145 = vst [vmem:[%s134 + $0x10] sm:$0xff] %v140
        %146 = vst [vmem:[%s134 + $0x18] sm:$0xff] %v142
        %s147 = sand.u32 %s52, 1
        %s148 = scalar_lea.sflag [#allocation4], %s147
        %s149 = sand.u32 %s52, 1
        %s150 = smul.addr %s149, 32
        %s151 = scalar_lea.vmem [#allocation5], %s150
        // Predicated region
        $region29: #{tpu_custom_call.1} parent=23 // pred_check
          %p152 = pneg %p62
        $region30: #{tpu_custom_call.1} parent=23 // pred_check_branch
          %154 = sbr.rel (%p152) target = $region32
        $region31: #{tpu_custom_call.1} parent=23 // pred_region
          %s156 = ssub.s32 512, 512
          %157 = vsyncadd %s148, %s156
          %s158 = smul.addr %s18, 4
          %s159 = smul.addr %s158, 128
          %s160 = scalar_lea.hbm %s1, %s159
          %s161 = sshll.u32 %s151, 4
          %s162 = int_to_ptr.vmem [resolvable:$true] %s161
          %167 = dma.vmem_to_hbm [thread:$0]  %s162, 512, %s160, %s148, 128, 128, 8
        $region32: #{tpu_custom_call.1} parent=23 // pred_fallthru
          _
      $region24: #{tpu_custom_call.1} parent=5 // pred_fallthru
        _
      %p168 = scmp.le.s32.totalorder 2, %s13
      // Predicated region
      $region33: #{tpu_custom_call.1} parent=5 // pred_check
        %p169 = pneg %p168
      $region34: #{tpu_custom_call.1} parent=5 // pred_check_branch
        %171 = sbr.rel (%p169) target = $region36
      $region35: #{tpu_custom_call.1} parent=5 // pred_region
        %s172 = ssub.s32 %s13, 2
        // Predicated region
        $region37: #{tpu_custom_call.1} parent=35 // pred_check
          %p173 = pneg %p68
        $region38: #{tpu_custom_call.1} parent=35 // pred_check_branch
          %175 = sbr.rel (%p173) target = $region40
        $region39: #{tpu_custom_call.1} parent=35 // pred_region
          %s176 = sand.u32 %s53, 1
          %s177 = scalar_lea.sflag [#allocation4], %s176
          %s178 = sand.u32 %s53, 1
          %s179 = smul.addr %s178, 32
          %s180 = scalar_lea.vmem [#allocation5], %s179
          %181 = dma.done %s177, 512
        $region40: #{tpu_custom_call.1} parent=35 // pred_fallthru
          _
      $region36: #{tpu_custom_call.1} parent=5 // pred_fallthru
        _
    $region6: #{tpu_custom_call.1} parent=1 // loop_footer
      %s17 = sadd.s32 1, %s13
    $region7: #{tpu_custom_call.1} parent=1 // loop_footer_branch
      %12 = sbr.rel target = $region3
    $region8: #{tpu_custom_call.1} parent=1 // loop_exit
      _
    %182 = vsyncpa [#allocation3], 1
    %s183 = scalar_lea.sflag [#allocation3], 1
    %184 = vsyncpa %s183, 1
    %185 = vsyncpa [#allocation4], 1
    %s186 = scalar_lea.sflag [#allocation4], 1
    %187 = vsyncpa %s186, 1

</llo_original>
